<compile_context>
chip_gen: v6e
topology: v6e:2x2x1
jax: 0.10.0
libtpu: 0.0.40
codegen_flags: <defaults>
</compile_context>

<pallas_src>
import functools

import jax
import jax.numpy as jnp
from jax.experimental import pallas as pl
from jax.experimental.pallas import tpu as pltpu


def _round_up(x, m):
    return ((x + m - 1) // m) * m


def _focal_loss_kernel(*refs, gamma, rows_total, tile_b, tiles_per_split,
                       has_alpha, need_row_mask):
    """One batch tile of focal loss.

    refs (has_alpha=True):  logits, targets, alpha, out, acc
    refs (has_alpha=False): logits, targets,        out, acc

    logits : (tile_b, C) native dtype, VMEM
    targets: (tile_b, 1) int32, VMEM
    alpha  : (1, C) f32, VMEM
    out    : (8, 128) f32 — per-split partial-sum block (lane/sublane aligned)
    acc    : (tile_b, 1) f32 VMEM scratch — per-row loss accumulator
    """
    if has_alpha:
        logits_ref, targets_ref, alpha_ref, out_ref, acc_ref = refs
    else:
        logits_ref, targets_ref, out_ref, acc_ref = refs
        alpha_ref = None

    j = pl.program_id(0)   # split index (parallel across cores)
    i = pl.program_id(1)   # tile within split (reduction axis)

    @pl.when(i == 0)
    def _init():
        acc_ref[...] = jnp.zeros_like(acc_ref)

    logits = logits_ref[...].astype(jnp.float32)              # (tb, C) f32
    targets = targets_ref[...]                                 # (tb, 1) i32
    tb, C = logits.shape

    # Boolean target mask (no float one-hot, no full-tile multiplies).
    class_ids = jax.lax.broadcasted_iota(jnp.int32, (tb, C), 1)
    tmask = class_ids == targets                               # (tb, C) bool

    # Cross entropy per row: lse - logit[target].
    m = jnp.max(logits, axis=-1, keepdims=True)                # (tb, 1)
    lse = m + jnp.log(jnp.sum(jnp.exp(logits - m), axis=-1, keepdims=True))
    logit_t = jnp.max(jnp.where(tmask, logits, -jnp.inf), axis=-1, keepdims=True)
    ce = lse - logit_t                                         # (tb, 1)

    pt = jnp.exp(-ce)

    # Per-row alpha weight (statically skipped when alpha is None).
    if has_alpha:
        at = jnp.sum(jnp.where(tmask, alpha_ref[...], 0.0), axis=-1,
                     keepdims=True)
        ce = at * ce

    # Focal modulation; gamma==2 avoids the EUP pow chain.
    w = 1.0 - pt
    if gamma == 2.0:
        mod = w * w
    elif gamma == 1.0:
        mod = w
    elif gamma == 0.0:
        mod = jnp.ones_like(w)
    else:
        mod = w ** jnp.float32(gamma)
    loss = mod * ce                                            # (tb, 1)

    # Mask rows past the true batch size (only emitted for ragged tiling).
    if need_row_mask:
        t = j * tiles_per_split + i                            # global tile id
        row_ids = t * tile_b + jax.lax.broadcasted_iota(jnp.int32, (tb, 1), 0)
        loss = jnp.where(row_ids < rows_total, loss, 0.0)

    acc_ref[...] += loss

    @pl.when(i == tiles_per_split - 1)
    def _finalize():
        partial = jnp.sum(acc_ref[...])
        out_ref[...] = jnp.full((8, 128), partial, dtype=jnp.float32)


def focal_loss(logits, targets, *, gamma=2.0, alpha=None, reduction="mean",
               tile_b=None, num_splits=None, vmem_limit_bytes=None):
    """JAX/Pallas equivalent of FocalLoss(gamma, alpha, reduction).

    logits : (B, C) float (any dtype; upcast to f32 inside the kernel)
    targets: (B,)   int, values in [0, C)  (out-of-range targets give inf loss,
             matching PyTorch's undefined behavior)
    """
    if reduction not in ("mean", "sum"):
        # TODO(synk): reduction='none' needs a per-row (B, 1) output spec.
        raise NotImplementedError("only reduction='mean'/'sum' implemented")

    B, C = logits.shape
    itemsize = jnp.dtype(logits.dtype).itemsize
    targets_2d = targets.astype(jnp.int32).reshape(B, 1)

    # Sublane multiple for the logits dtype (8 f32, 16 bf16, 32 int8/fp8).
    sub = {4: 8, 2: 16, 1: 32}.get(itemsize, 8)
    padded_c = _round_up(C, 128)                       # lane padding in VMEM

    # Tile sizing: ~8 MiB per logits VMEM buffer (x2 double buffering), sized
    # on the lane-padded footprint, capped at 4096 rows so (tile_b, 1)
    # intermediates and the lane-padded targets/scratch stay cheap.
    if tile_b is None:
        target_bytes = 8 << 20
        tile_b = (target_bytes // (padded_c * itemsize)) // sub * sub
        tile_b = int(max(sub, min(tile_b, 4096)))
    else:
        tile_b = int(max(sub, (int(tile_b) // sub) * sub))
    if B <= tile_b:
        tile_b = B            # single full-array block: no (8,128) constraint
    num_tiles = pl.cdiv(B, tile_b)

    # Split the batch into per-core partial sums (megacore on v7x; a plain
    # serial loop elsewhere).
    if num_splits is None:
        num_splits = 2 if num_tiles >= 2 else 1
    num_splits = int(max(1, min(int(num_splits), num_tiles)))
    tiles_per_split = pl.cdiv(num_tiles, num_splits)
    padded_rows = num_splits * tiles_per_split * tile_b
    need_row_mask = padded_rows != B

    has_alpha = alpha is not None

    def tile_map(j, i):
        # Clamp padded split tiles to the last real block; their rows are
        # masked out by the row mask inside the kernel.
        return (jnp.minimum(j * tiles_per_split + i, num_tiles - 1), 0)

    args = [logits, targets_2d]
    in_specs = [
        pl.BlockSpec((tile_b, C), tile_map),           # logits tile
        pl.BlockSpec((tile_b, 1), tile_map),           # targets tile
    ]
    if has_alpha:
        alpha_arr = jnp.asarray(alpha, jnp.float32).reshape(1, C)
        args.append(alpha_arr)
        in_specs.append(pl.BlockSpec((1, C), lambda j, i: (0, 0)))  # resident

    # VMEM budget from the padded footprint (+headroom), capped under v7x's
    # 64 MiB physical VMEM; v5e/v6e can afford this over their scoped defaults.
    if vmem_limit_bytes is None:
        logits_buf = tile_b * padded_c * itemsize
        aux_buf = tile_b * 128 * 4                     # lane-padded (tb,1)
        est = 2 * logits_buf + 2 * aux_buf + aux_buf + padded_c * 4 + 4096
        vmem_limit_bytes = int(min(max(2 * est + (8 << 20), 32 << 20),
                                   48 << 20))

    kernel = functools.partial(
        _focal_loss_kernel,
        gamma=float(gamma), rows_total=B, tile_b=tile_b,
        tiles_per_split=tiles_per_split, has_alpha=has_alpha,
        need_row_mask=need_row_mask)

    out = pl.pallas_call(
        kernel,
        out_shape=jax.ShapeDtypeStruct((num_splits * 8, 128), jnp.float32),
        grid_spec=pltpu.PrefetchScalarGridSpec(
            num_scalar_prefetch=0,
            grid=(num_splits, tiles_per_split),
            in_specs=in_specs,
            out_specs=pl.BlockSpec((8, 128), lambda j, i: (j, 0)),
            scratch_shapes=[pltpu.VMEM((tile_b, 1), jnp.float32)],
        ),
        compiler_params=pltpu.CompilerParams(
            dimension_semantics=("parallel", "arbitrary"),
            vmem_limit_bytes=int(vmem_limit_bytes),
        ),
    )(*args)

    partials = out[::8, 0]                              # one value per split
    total = jnp.sum(partials)
    if reduction == "mean":
        total = total / jnp.float32(B)
    return total


def _reference_focal_loss(logits, targets, gamma, alpha, reduction="mean"):
    """Pure-JAX reference mirroring the PyTorch module."""
    logits = logits.astype(jnp.float32)
    lse = jax.nn.logsumexp(logits, axis=-1)
    logit_t = jnp.take_along_axis(logits, targets[:, None], axis=-1)[:, 0]
    ce = lse - logit_t
    pt = jnp.exp(-ce)
    if alpha is not None:
        at = jnp.asarray(alpha, jnp.float32)[targets]
        ce = at * ce
    loss = (1.0 - pt) ** gamma * ce
    return jnp.mean(loss) if reduction == "mean" else jnp.sum(loss)


if __name__ == "__main__":
    key = jax.random.PRNGKey(0)
    k1, k2, k3, k4, k5, k6 = jax.random.split(key, 6)

    # Case 1: binary classification with per-class alpha (matches module docs).
    B, C = 8, 2
    gamma = 2.0
    alpha = [0.25, 0.75]
    logits = jax.random.normal(k1, (B, C), dtype=jnp.float32)
    targets = jax.random.randint(k2, (B,), 0, C, dtype=jnp.int32)

    out = jax.block_until_ready(focal_loss(logits, targets, gamma=gamma, alpha=alpha))
    ref = _reference_focal_loss(logits, targets, gamma, alpha)
    assert jnp.allclose(out, ref, rtol=1e-4, atol=1e-6), (out, ref)

    # Case 2: multi-tile grid, 2-way split, partial + padded tiles (exercises
    # masking and the clamped index_map), no alpha, reduction='sum'.
    B2, C2 = 100, 8
    logits2 = jax.random.normal(k3, (B2, C2), dtype=jnp.float32)
    targets2 = jax.random.randint(k4, (B2,), 0, C2, dtype=jnp.int32)

    out2 = jax.block_until_ready(
        focal_loss(logits2, targets2, gamma=2.0, alpha=None, tile_b=16,
                   reduction="sum"))
    ref2 = _reference_focal_loss(logits2, targets2, 2.0, None, reduction="sum")
    assert jnp.allclose(out2, ref2, rtol=1e-4, atol=1e-6), (out2, ref2)

    # Case 3: bf16 logits streamed natively (upcast in VMEM), default tiling.
    B3, C3 = 64, 128
    logits3 = jax.random.normal(k5, (B3, C3), dtype=jnp.bfloat16)
    targets3 = jax.random.randint(k6, (B3,), 0, C3, dtype=jnp.int32)

    out3 = jax.block_until_ready(focal_loss(logits3, targets3, gamma=2.0, alpha=None))
    ref3 = _reference_focal_loss(logits3, targets3, 2.0, None)
    assert jnp.allclose(out3, ref3, rtol=1e-4, atol=1e-6), (out3, ref3)

    print("KERNEL_OK")
</pallas_src>

<mosaic_0001>
module attributes {stable_mosaic.version = 11 : i64} {
  func.func @_focal_loss_kernel(%arg0: i32, %arg1: i32, %arg2: memref<8x2xf32, #tpu.memory_space<vmem>>, %arg3: memref<8x1xi32, #tpu.memory_space<vmem>>, %arg4: memref<1x2xf32, #tpu.memory_space<vmem>>, %arg5: memref<8x128xf32, #tpu.memory_space<vmem>>, %arg6: memref<8x1xf32, #tpu.memory_space<vmem>>) attributes {dimension_semantics = [#tpu.dimension_semantics<parallel>, #tpu.dimension_semantics<arbitrary>], iteration_bounds = array<i64: 1, 1>, scalar_prefetch = 0 : i64, scratch_operands = 1 : i64, tpu.core_type = #tpu.core_type<tc>, window_params = [{transform_indices = @transform_0, window_bounds = array<i64: 8, 2>}, {transform_indices = @transform_1, window_bounds = array<i64: 8, 1>}, {pipeline_mode = #tpu.pipeline_mode<synchronous>, transform_indices = @transform_2, window_bounds = array<i64: 1, 2>}, {transform_indices = @transform_3, window_bounds = array<i64: 8, 128>}]} {
    %c0_i32 = arith.constant 0 : i32
    %0 = arith.cmpi eq, %arg1, %c0_i32 : i32
    %1 = arith.extui %0 : i1 to i32
    %c0_i32_0 = arith.constant 0 : i32
    %2 = arith.cmpi ne, %1, %c0_i32_0 : i32
    scf.if %2 {
      %cst_19 = arith.constant 0.000000e+00 : f32
      %43 = vector.broadcast %cst_19 : f32 to vector<8x1xf32>
      %c0_20 = arith.constant 0 : index
      %c0_21 = arith.constant 0 : index
      %44 = vector.load %arg6[%c0_20, %c0_21] : memref<8x1xf32, #tpu.memory_space<vmem>>, vector<8x1xf32>
      tpu.vector_store %arg6[%c0_20, %c0_21], %43 {strides = array<i32>} : memref<8x1xf32, #tpu.memory_space<vmem>>, vector<8x1xf32>,
    } else {
    }
    %c0 = arith.constant 0 : index
    %c0_1 = arith.constant 0 : index
    %3 = vector.load %arg2[%c0, %c0_1] : memref<8x2xf32, #tpu.memory_space<vmem>>, vector<8x2xf32>
    %c0_2 = arith.constant 0 : index
    %c0_3 = arith.constant 0 : index
    %4 = vector.load %arg3[%c0_2, %c0_3] : memref<8x1xi32, #tpu.memory_space<vmem>>, vector<8x1xi32>
    %5 = tpu.iota {dimensions = array<i32: 1>} : vector<8x2xi32>
    %6 = vector.broadcast %4 : vector<8x1xi32> to vector<8x2xi32>
    %7 = arith.cmpi eq, %5, %6 : vector<8x2xi32>
    %cst = arith.constant dense<0xFF800000> : vector<8xf32>
    %8 = vector.multi_reduction <maximumf>, %3, %cst [1] : vector<8x2xf32> to vector<8xf32>
    %9 = vector.shape_cast %8 : vector<8xf32> to vector<8x1xf32>
    %10 = vector.broadcast %9 : vector<8x1xf32> to vector<8x2xf32>
    %11 = arith.subf %3, %10 : vector<8x2xf32>
    %12 = math.exp %11 : vector<8x2xf32>
    %cst_4 = arith.constant dense<0.000000e+00> : vector<8xf32>
    %13 = vector.multi_reduction <add>, %12, %cst_4 [1] : vector<8x2xf32> to vector<8xf32>
    %14 = vector.shape_cast %13 : vector<8xf32> to vector<8x1xf32>
    %15 = math.log %14 : vector<8x1xf32>
    %16 = arith.addf %9, %15 : vector<8x1xf32>
    %cst_5 = arith.constant 0xFF800000 : f32
    %17 = vector.broadcast %cst_5 : f32 to vector<8x2xf32>
    %18 = arith.select %7, %3, %17 : vector<8x2xi1>, vector<8x2xf32>
    %cst_6 = arith.constant dense<0xFF800000> : vector<8xf32>
    %19 = vector.multi_reduction <maximumf>, %18, %cst_6 [1] : vector<8x2xf32> to vector<8xf32>
    %20 = vector.shape_cast %19 : vector<8xf32> to vector<8x1xf32>
    %21 = arith.subf %16, %20 : vector<8x1xf32>
    %cst_7 = arith.constant 0.000000e+00 : f32
    %22 = vector.broadcast %cst_7 : f32 to vector<8x1xf32>
    %23 = arith.subf %22, %21 : vector<8x1xf32>
    %24 = math.exp %23 : vector<8x1xf32>
    %c0_8 = arith.constant 0 : index
    %c0_9 = arith.constant 0 : index
    %25 = vector.load %arg4[%c0_8, %c0_9] : memref<1x2xf32, #tpu.memory_space<vmem>>, vector<1x2xf32>
    %cst_10 = arith.constant 0.000000e+00 : f32
    %26 = vector.shape_cast %25 : vector<1x2xf32> to vector<1x2xf32>
    %27 = vector.broadcast %26 : vector<1x2xf32> to vector<8x2xf32>
    %28 = vector.broadcast %cst_10 : f32 to vector<8x2xf32>
    %29 = arith.select %7, %27, %28 : vector<8x2xi1>, vector<8x2xf32>
    %cst_11 = arith.constant dense<0.000000e+00> : vector<8xf32>
    %30 = vector.multi_reduction <add>, %29, %cst_11 [1] : vector<8x2xf32> to vector<8xf32>
    %31 = vector.shape_cast %30 : vector<8xf32> to vector<8x1xf32>
    %32 = arith.mulf %31, %21 : vector<8x1xf32>
    %cst_12 = arith.constant 1.000000e+00 : f32
    %33 = vector.broadcast %cst_12 : f32 to vector<8x1xf32>
    %34 = arith.subf %33, %24 : vector<8x1xf32>
    %35 = arith.mulf %34, %34 : vector<8x1xf32>
    %36 = arith.mulf %35, %32 : vector<8x1xf32>
    %c0_13 = arith.constant 0 : index
    %c0_14 = arith.constant 0 : index
    %37 = vector.load %arg6[%c0_13, %c0_14] : memref<8x1xf32, #tpu.memory_space<vmem>>, vector<8x1xf32>
    %38 = arith.addf %37, %36 : vector<8x1xf32>
    %c0_15 = arith.constant 0 : index
    %c0_16 = arith.constant 0 : index
    %39 = vector.load %arg6[%c0_15, %c0_16] : memref<8x1xf32, #tpu.memory_space<vmem>>, vector<8x1xf32>
    tpu.vector_store %arg6[%c0_15, %c0_16], %38 {strides = array<i32>} : memref<8x1xf32, #tpu.memory_space<vmem>>, vector<8x1xf32>,
    %c0_i32_17 = arith.constant 0 : i32
    %40 = arith.cmpi eq, %arg1, %c0_i32_17 : i32
    %41 = arith.extui %40 : i1 to i32
    %c0_i32_18 = arith.constant 0 : i32
    %42 = arith.cmpi ne, %41, %c0_i32_18 : i32
    scf.if %42 {
      %c0_19 = arith.constant 0 : index
      %c0_20 = arith.constant 0 : index
      %43 = vector.load %arg6[%c0_19, %c0_20] : memref<8x1xf32, #tpu.memory_space<vmem>>, vector<8x1xf32>
      %44 = vector.shape_cast %43 : vector<8x1xf32> to vector<1x8x1xf32>
      %cst_21 = arith.constant dense<0.000000e+00> : vector<1xf32>
      %45 = vector.multi_reduction <add>, %44, %cst_21 [1, 2] : vector<1x8x1xf32> to vector<1xf32>
      %46 = vector.shape_cast %45 : vector<1xf32> to vector<1x1x1xf32>
      %47 = vector.extract %46[0, 0, 0] : f32 from vector<1x1x1xf32>
      %48 = vector.broadcast %47 : f32 to vector<8x128xf32>
      %c0_22 = arith.constant 0 : index
      %c0_23 = arith.constant 0 : index
      %49 = vector.load %arg5[%c0_22, %c0_23] : memref<8x128xf32, #tpu.memory_space<vmem>>, vector<8x128xf32>
      tpu.vector_store %arg5[%c0_22, %c0_23], %48 {strides = array<i32>} : memref<8x128xf32, #tpu.memory_space<vmem>>, vector<8x128xf32>,
    } else {
    }
    return
  }
  func.func @transform_0(%arg0: i32, %arg1: i32) -> (i32, i32) {
    %c1_i32 = arith.constant 1 : i32
    %0 = arith.muli %arg0, %c1_i32 : i32
    %1 = arith.addi %0, %arg1 : i32
    %c0_i32 = arith.constant 0 : i32
    %2 = arith.minsi %1, %c0_i32 : i32
    %c0_i32_0 = arith.constant 0 : i32
    %c0_i32_1 = arith.constant 0 : i32
    return %2, %c0_i32_0 : i32, i32
  }
  func.func @transform_1(%arg0: i32, %arg1: i32) -> (i32, i32) {
    %c1_i32 = arith.constant 1 : i32
    %0 = arith.muli %arg0, %c1_i32 : i32
    %1 = arith.addi %0, %arg1 : i32
    %c0_i32 = arith.constant 0 : i32
    %2 = arith.minsi %1, %c0_i32 : i32
    %c0_i32_0 = arith.constant 0 : i32
    %c0_i32_1 = arith.constant 0 : i32
    return %2, %c0_i32_0 : i32, i32
  }
  func.func @transform_2(%arg0: i32, %arg1: i32) -> (i32, i32) {
    %c0_i32 = arith.constant 0 : i32
    %c0_i32_0 = arith.constant 0 : i32
    %c0_i32_1 = arith.constant 0 : i32
    return %c0_i32, %c0_i32_0 : i32, i32
  }
  func.func @transform_3(%arg0: i32, %arg1: i32) -> (i32, i32) {
    %c0_i32 = arith.constant 0 : i32
    %c0_i32_0 = arith.constant 0 : i32
    return %arg0, %c0_i32 : i32, i32
  }
}

</mosaic_0001>

<llo_original>
// kernel: tpu_custom_call.1
$region0: #{tpu_custom_call.1}
  #allocation0 [shape = 'u32[]', space=smem, size = 0x4, offset = 0x4, fixed_abs, tag = 'smem constant byte address 0x4 - core index']
  #allocation1 [shape = 'u32[144,128]{1,0:T(1,128)}', space=vmem, size = 0x12000, scoped, tag = 'internal scratch']
  #allocation2 [shape = 'f32[8,1]{1,0:T(8,128)}', space=vmem, size = 0x1000, scoped, tag = 'scratch operand']
  %s0 = inlined_call_operand.vmem [shape: f32[8,2], index: 0, kind: input, shape index: {}]
  %s1 = inlined_call_operand.vmem [shape: s32[8,1], index: 1, kind: input, shape index: {}]
  %s2 = inlined_call_operand.vmem [shape: f32[1,2], index: 2, kind: input, shape index: {}]
  %s3 = inlined_call_operand.hbm [shape: f32[8,128], index: 3, kind: output, shape index: {}]
  %s4 = sld [smem:[#allocation0]]
  $region30: #{tpu_custom_call.1} parent=0
    _
  %s6 = ssub.s32 1, %s4
  %s7 = scalar_select 0, %s6, %s4
  $region1: #{tpu_custom_call.1} parent=0
    #allocation3 [shape = 'u8[4096]{0}', space=vmem, size = 0x1000, scoped, tag = 'output window, operand 0, single buffered']
    #allocation4 [shape = 's32[1]{0}', space=sflag, size = 0x4, scoped, tag = 'scoped memory for tpu_custom_call.1']
    %8 = vsyncpa [#allocation4], 0
    // Predicated region
    $region2: #{tpu_custom_call.1} parent=1 // pred_check
      _
    $region3: #{tpu_custom_call.1} parent=1 // pred_check_branch
      %10 = sbr.rel (0) target = $region5
    $region4: #{tpu_custom_call.1} parent=1 // pred_region
      %s11 = sadd.s32 0, 0
      %p12 = scmp.lt.s32.totalorder %s11, 0
      %s13 = scalar_select %p12, %s11, 0
      %p14 = scmp.lt.s32.totalorder %s13, 0
      %s15 = scalar_select %p14, %s13, 0
      %s16 = smul.addr %s15, 8
      %s17 = scalar_lea.vmem %s0, %s16
      %s18 = sadd.s32 0, 0
      %p19 = scmp.lt.s32.totalorder %s18, 0
      %s20 = scalar_select %p19, %s18, 0
    $region5: #{tpu_custom_call.1} parent=1 // pred_fallthru
      _
    // Predicated region
    $region6: #{tpu_custom_call.1} parent=1 // pred_check
      _
    $region7: #{tpu_custom_call.1} parent=1 // pred_check_branch
      %22 = sbr.rel (0) target = $region9
    $region8: #{tpu_custom_call.1} parent=1 // pred_region
      %s23 = sadd.s32 0, 0
      %p24 = scmp.lt.s32.totalorder %s23, 0
      %s25 = scalar_select %p24, %s23, 0
      %p26 = scmp.lt.s32.totalorder %s25, 0
      %s27 = scalar_select %p26, %s25, 0
      %s28 = smul.addr %s27, 8
      %s29 = scalar_lea.vmem %s1, %s28
      %s30 = sadd.s32 0, 0
      %p31 = scmp.lt.s32.totalorder %s30, 0
      %s32 = scalar_select %p31, %s30, 0
    $region9: #{tpu_custom_call.1} parent=1 // pred_fallthru
      _
    // Predicated region
    $region10: #{tpu_custom_call.1} parent=1 // pred_check
      _
    $region11: #{tpu_custom_call.1} parent=1 // pred_check_branch
      %34 = sbr.rel (0) target = $region13
    $region12: #{tpu_custom_call.1} parent=1 // pred_region
      _
    $region13: #{tpu_custom_call.1} parent=1 // pred_fallthru
      _
    %s35 = sadd.s32 0, 0
    %p36 = scmp.lt.s32.totalorder %s35, 0
    %s37 = scalar_select %p36, %s35, 0
    %p38 = scmp.lt.s32.totalorder %s37, 0
    %s39 = scalar_select %p38, %s37, 0
    %s40 = smul.addr %s39, 8
    %s41 = scalar_lea.vmem %s0, %s40
    %s42 = sadd.s32 0, 0
    %p43 = scmp.lt.s32.totalorder %s42, 0
    %s44 = scalar_select %p43, %s42, 0
    %p45 = scmp.lt.s32.totalorder %s44, 0
    %s46 = scalar_select %p45, %s44, 0
    %s47 = smul.addr %s46, 8
    %s48 = scalar_lea.vmem %s1, %s47
    %s49 = sadd.s32 0, 0
    %p50 = scmp.lt.s32.totalorder %s49, 0
    %s51 = scalar_select %p50, %s49, 0
    %p52 = scmp.lt.s32.totalorder %s51, 0
    %s53 = scalar_select %p52, %s51, 0
    %s54 = smul.addr %s53, 8
    %s55 = scalar_lea.vmem %s0, %s54
    %s56 = sadd.s32 0, 0
    %p57 = scmp.lt.s32.totalorder %s56, 0
    %s58 = scalar_select %p57, %s56, 0
    %s59 = sadd.s32 0, 0
    %p60 = scmp.lt.s32.totalorder %s59, 0
    %s61 = scalar_select %p60, %s59, 0
    %p62 = scmp.lt.s32.totalorder %s61, 0
    %s63 = scalar_select %p62, %s61, 0
    %s64 = smul.addr %s63, 8
    %s65 = scalar_lea.vmem %s1, %s64
    %s66 = sadd.s32 0, 0
    %p67 = scmp.lt.s32.totalorder %s66, 0
    %s68 = scalar_select %p67, %s66, 0
    %p69 = scmp.eq.s32.totalorder 0, 0
    // Predicated region
    $region14: #{tpu_custom_call.1} parent=1 // pred_check
      %p70 = pneg %p69
    $region15: #{tpu_custom_call.1} parent=1 // pred_check_branch
      %72 = sbr.rel (%p70) target = $region17
    $region16: #{tpu_custom_call.1} parent=1 // pred_region
      %vm73 = vcmask 7168
      %74 = vst.msk [vmem:[#allocation2] sm:$0xff] %vm73, 0.0
    $region17: #{tpu_custom_call.1} parent=1 // pred_fallthru
      _
    %v75 = vld [vmem:[%s55] sm:$0xff]
    %v76 = vld [vmem:[%s65] sm:$0xff]
    %v77 = vlaneseq
    %v78 = vand.u32 %v77, 127
    %79 = vset.pattern.permute.xlu0 0
    %80 = vperm.xlu0 %79, %v76
    %v81 = vpop.permute.xlu0 %80
    %vm82 = vcmp.eq.s32.totalorder %v78, %v81
    %vm83 = vcmask 15360
    %v84 = vsel %vm83, %v75, -inf
    %85 = vmax.xlane.f32.xlu0 %v84
    %v86 = vpop.xlane.xlu0 %85
    %v87 = vsub.f32 %v75, %v86
    %v88 = vmul.f32 %v87, 1.442695
    %v89 = vpow.pop %v88
    %v90 = vsel %vm83, %v89, 0.0
    %91 = vadd.xlane.f32.xlu0 %v90
    %v92 = vpop.xlane.xlu0 %91
    %v93 = vlog2.pop %v92
    %v94 = vmul.f32 %v93, 0.6931472
    %v95 = vadd.f32 %v86, %v94
    %v96 = vsel %vm82, %v75, -inf
    %v97 = vsel %vm83, %v96, -inf
    %98 = vmax.xlane.f32.xlu0 %v97
    %v99 = vpop.xlane.xlu0 %98
    %v100 = vsub.f32 %v95, %v99
    %v101 = vsub.f32 0.0, %v100
    %v102 = vmul.f32 %v101, 1.442695
    %v103 = vpow.pop %v102
    %v104 = vld [vmem:[%s2] sm:$0x1]
    %v106 = vlaneseq
    %v107 = vshrl.u32 %v106, 7
    %v108 = vsub.s32 0, %v107
    %v109 = vrot.slane %v104, %v108
    %v111 = vsel %vm82, %v109, 0.0
    %v112 = vsel %vm83, %v111, 0.0
    %113 = vadd.xlane.f32.xlu0 %v112
    %v114 = vpop.xlane.xlu0 %113
    %v115 = vmul.f32 %v114, %v100
    %v116 = vsub.f32 1.0, %v103
    %v117 = vmul.f32 %v116, %v116
    %v118 = vmul.f32 %v117, %v115
    %v119 = vld [vmem:[#allocation2] sm:$0xff]
    %v120 = vadd.f32 %v119, %v118
    %vm121 = vcmask 7168
    %122 = vst.msk [vmem:[#allocation2] sm:$0xff] %vm121, %v120
    // Predicated region
    $region18: #{tpu_custom_call.1} parent=1 // pred_check
      %p123 = pneg %p69
    $region19: #{tpu_custom_call.1} parent=1 // pred_check_branch
      %125 = sbr.rel (%p123) target = $region21
    $region20: #{tpu_custom_call.1} parent=1 // pred_region
      %v126 = vld [vmem:[#allocation2] sm:$0xff]
      %v127 = vsel %vm121, %v126, 0.0
      %128 = vadd.xlane.f32.xlu0 %v127
      %v129 = vpop.xlane.xlu0 %128
      %v130 = vrot.slane %v129, 4
      %v131 = vadd.f32 %v129, %v130
      %v132 = vrot.slane %v131, 2
      %v133 = vadd.f32 %v131, %v132
      %v134 = vrot.slane %v133, 1
      %v135 = vadd.f32 %v133, %v134
      %s136 = vtos %v135
      %v137 = vstv %s136
      %138 = vst [vmem:[#allocation3] sm:$0xff] %v137
    $region21: #{tpu_custom_call.1} parent=1 // pred_fallthru
      _
    // Predicated region
    $region22: #{tpu_custom_call.1} parent=1 // pred_check
      _
    $region23: #{tpu_custom_call.1} parent=1 // pred_check_branch
      %140 = sbr.rel (0) target = $region25
    $region24: #{tpu_custom_call.1} parent=1 // pred_region
      %s142 = ssub.s32 128, 128
      %143 = vsyncadd [#allocation4], %s142
      %s145 = sshll.u32 [#allocation3], 4
      %s146 = int_to_ptr.vmem [resolvable:$true] %s145
      %148 = dma.vmem_to_hbm [thread:$0]  %s146, 128, %s3, [#allocation4]
    $region25: #{tpu_custom_call.1} parent=1 // pred_fallthru
      _
    // Predicated region
    $region26: #{tpu_custom_call.1} parent=1 // pred_check
      _
    $region27: #{tpu_custom_call.1} parent=1 // pred_check_branch
      %150 = sbr.rel (0) target = $region29
    $region28: #{tpu_custom_call.1} parent=1 // pred_region
      %151 = dma.done [#allocation4], 128
    $region29: #{tpu_custom_call.1} parent=1 // pred_fallthru
      _
    %152 = vsyncpa [#allocation4], 1

</llo_original>
